<compile_context>
chip_gen: v5e
topology: v5e:2x2
jax: 0.10.0
libtpu: 0.0.40
codegen_flags: <defaults>
</compile_context>

<pallas_src>
import jax
import jax.numpy as jnp
import numpy as np
from jax.experimental import pallas as pl
from jax.experimental.pallas import tpu as pltpu


# ---------------------------------------------------------------------------
# Kernel
# ---------------------------------------------------------------------------
def gat_kernel(x_ref, adj_ref, wqkv_ref, bqkv_ref, wo_ref, bo_ref, out_ref):
    Bt, N, Din = x_ref.shape          # padded: Din, Dp multiples of 128, N multiple of 8/16
    Dp = wo_ref.shape[-1]
    op_dtype = x_ref.dtype            # MXU operand dtype (f32 or bf16); accumulation is f32.

    # ---- single fused QKV projection (Linear + in_proj + q-scale already folded) ----------
    x2 = x_ref[...].reshape(Bt * N, Din)                     # free relayout (N, D padded)
    qkv = (jnp.dot(x2, wqkv_ref[...], preferred_element_type=jnp.float32)
           + bqkv_ref[...]).astype(op_dtype)                 # (Bt*N, 3*Dp), one live slab
    q3 = qkv[:, 0 * Dp:1 * Dp].reshape(Bt, N, Dp)            # lane-aligned static slices
    k3 = qkv[:, 1 * Dp:2 * Dp].reshape(Bt, N, Dp)
    v3 = qkv[:, 2 * Dp:3 * Dp].reshape(Bt, N, Dp)

    # ---- masked scaled-dot-product attention (scale folded into the q weights) ------------
    # Batched q @ k^T contracting the LAST dims of both: no explicit k transpose.
    scores = jax.lax.dot_general(
        q3, k3,
        dimension_numbers=(((2,), (2,)), ((0,), (0,))),
        preferred_element_type=jnp.float32)                  # (Bt, N, N) f32

    allowed = adj_ref[...] != 0                              # int8 predicate, no f32 temp
    # -inf on disallowed edges matches PyTorch exactly (a row with no allowed edges yields
    # NaN there too; callers are expected to include self-loops; padded rows get a self edge
    # in the wrapper so they stay finite).
    scores = jnp.where(allowed, scores, -jnp.inf)

    m = jnp.max(scores, axis=-1, keepdims=True)
    p = jnp.exp(scores - m)
    denom = jnp.sum(p, axis=-1, keepdims=True)
    attn = (p / denom).astype(op_dtype)                      # exact divide (bit-accurate softmax)

    # TODO(synk): for N beyond ~1-2k (half that on v7x's 64 MiB VMEM), switch this section to
    # a flash-style online-softmax loop over key tiles instead of holding the full NxN tile.
    ctx = jax.lax.dot_general(
        attn, v3,
        dimension_numbers=(((2,), (1,)), ((0,), (0,))),
        preferred_element_type=jnp.float32).astype(op_dtype) # (Bt, N, Dp)

    # ---- MultiheadAttention out_proj (full-lane 128-multiple store) ------------------------
    ctx2 = ctx.reshape(Bt * N, Dp)
    out = jnp.dot(ctx2, wo_ref[...], preferred_element_type=jnp.float32) + bo_ref[...]
    out_ref[...] = out.reshape(Bt, N, Dp).astype(out_ref.dtype)


# ---------------------------------------------------------------------------
# Wrapper helpers
# ---------------------------------------------------------------------------
def _round_up(x, m):
    return ((x + m - 1) // m) * m


def _vmem_capacity_bytes():
    try:
        return int(pltpu.get_tpu_info().vmem_capacity_bytes)
    except Exception:
        return 128 * 1024 * 1024  # conservative default if the query is unavailable


def _fuse_params(params, d_out, din_pad, dout_pad, op_dtype):
    """Fold Linear + in_proj (+ attention scale for q), pad to lane width, concat Q|K|V."""
    scale = 1.0 / np.sqrt(np.float32(d_out))          # scale uses the TRUE head dim
    wq = (params["wq"] @ params["wqi"]) * scale
    bq = (params["bq"] @ params["wqi"] + params["bqi"]) * scale
    wk = params["wk"] @ params["wki"]
    bk = params["bk"] @ params["wki"] + params["bki"]
    wv = params["wv"] @ params["wvi"]
    bv = params["bv"] @ params["wvi"] + params["bvi"]
    wo, bo = params["wo"], params["bo"]

    def pad_w(w, rows, cols):
        return jnp.pad(w, ((0, rows - w.shape[0]), (0, cols - w.shape[1])))

    def pad_b(b, cols):
        return jnp.pad(b, ((0, 0), (0, cols - b.shape[1])))

    wqkv = jnp.concatenate([pad_w(wq, din_pad, dout_pad),
                            pad_w(wk, din_pad, dout_pad),
                            pad_w(wv, din_pad, dout_pad)], axis=1)   # (Din_pad, 3*Dout_pad)
    bqkv = jnp.concatenate([pad_b(bq, dout_pad),
                            pad_b(bk, dout_pad),
                            pad_b(bv, dout_pad)], axis=1)            # (1, 3*Dout_pad)
    wo_p = pad_w(wo, dout_pad, dout_pad)
    bo_p = pad_b(bo, dout_pad)

    # MXU operands in compute dtype; biases stay f32 (added to f32 accumulators).
    return (wqkv.astype(op_dtype), bqkv.astype(jnp.float32),
            wo_p.astype(op_dtype), bo_p.astype(jnp.float32))


# ---------------------------------------------------------------------------
# Public entry point
# ---------------------------------------------------------------------------
def gat_forward(node_encodings, adj_mat, params, *, batch_block=None,
                compute_dtype=jnp.float32):
    """node_encodings: [B, N, D_in], adj_mat: [B, N, N] bool -> [B, N, D_out] f32.

    compute_dtype controls the MXU operand precision (bfloat16 is recommended on all current
    generations -- v5e's MXU is also a bf16 unit); accumulation and softmax always run in f32.
    """
    B, N, Din = node_encodings.shape
    Dout = params["wq"].shape[1]
    cdt = np.dtype(compute_dtype)
    elt = cdt.itemsize

    # ---- lane/sublane-aligned padded shapes -------------------------------------------------
    Dip = _round_up(Din, 128)
    Dp = _round_up(Dout, 128)
    sublane = 16 if elt == 2 else 8
    Np = _round_up(N, sublane)

    # ---- generation-aware VMEM budgets ------------------------------------------------------
    vmem_cap = _vmem_capacity_bytes()
    vmem_limit = int(max(32 * 1024 * 1024,
                         min(100 * 1024 * 1024, vmem_cap - 8 * 1024 * 1024)))
    weight_bytes = (Dip * 3 * Dp + Dp * Dp) * elt + 4 * Dp * 4
    budget = max(4 * 1024 * 1024, vmem_cap // 3 - weight_bytes)

    # Per-batch-element VMEM working set: double-buffered pipeline tiles (x / int8 adj /
    # f32 out) plus the in-kernel intermediates (qkv f32 temp + op-dtype slab, scores+p f32,
    # op-dtype attn, ctx and out slabs).  Conservative by construction.
    per_b = (2 * (Np * Dip * elt + Np * Np + Np * Dp * 4)
             + 3 * Np * Dp * (4 + elt)
             + Np * Np * (8 + elt)
             + 2 * Np * Dp * 4)
    if batch_block is None:
        batch_block = max(1, min(B, budget // max(per_b, 1)))
        if B > 1:
            # keep >=2 grid steps so v7x's two TensorCores both get work on the parallel axis
            batch_block = max(1, min(batch_block, -(-B // 2)))
    Bt = int(batch_block)
    Bp = _round_up(B, Bt)

    # ---- pad inputs (batch, nodes, features) ------------------------------------------------
    x = jnp.pad(node_encodings.astype(cdt),
                ((0, Bp - B), (0, Np - N), (0, Dip - Din)))
    adj_i8 = jnp.pad(adj_mat.astype(jnp.int8),
                     ((0, Bp - B), (0, Np - N), (0, Np - N)))
    if Bp != B or Np != N:
        # Give purely-padding query rows a self edge so their (discarded) softmax stays
        # finite; real rows / columns are untouched (padded key columns stay masked off).
        b_pad = (jnp.arange(Bp) >= B)
        n_pad = (jnp.arange(Np) >= N)
        need_self = jnp.logical_or(b_pad[:, None], n_pad[None, :]).astype(jnp.int8)
        adj_i8 = jnp.maximum(
            adj_i8, need_self[:, :, None] * jnp.eye(Np, dtype=jnp.int8)[None])

    fused = _fuse_params(params, Dout, Dip, Dp, cdt)

    # Weights/biases: resident in VMEM for the whole kernel, no per-step DMA or double-buffer.
    wspec = pl.BlockSpec(memory_space=pltpu.MemorySpace.VMEM)
    in_specs = [
        pl.BlockSpec((Bt, Np, Dip), lambda b: (b, 0, 0)),
        pl.BlockSpec((Bt, Np, Np), lambda b: (b, 0, 0)),
    ] + [wspec] * 4

    fn = pl.pallas_call(
        gat_kernel,
        out_shape=jax.ShapeDtypeStruct((Bp, Np, Dp), jnp.float32),
        grid_spec=pltpu.PrefetchScalarGridSpec(
            num_scalar_prefetch=0,
            grid=(Bp // Bt,),
            in_specs=in_specs,
            out_specs=pl.BlockSpec((Bt, Np, Dp), lambda b: (b, 0, 0)),
        ),
        compiler_params=pltpu.CompilerParams(
            dimension_semantics=("parallel",),   # batch blocks are independent
            vmem_limit_bytes=vmem_limit,
        ),
    )
    out = fn(x, adj_i8, *fused)
    return out[:B, :N, :Dout]


# ---------------------------------------------------------------------------
# Pure-JAX reference + synthetic params
# ---------------------------------------------------------------------------
def gat_reference(node_encodings, adj_mat, params):
    """Pure-JAX f32 reference matching the PyTorch GAT forward (unfused two-step projections)."""
    x = node_encodings.astype(jnp.float32)
    q = x @ params["wq"] + params["bq"]
    k = x @ params["wk"] + params["bk"]
    v = x @ params["wv"] + params["bv"]
    q = q @ params["wqi"] + params["bqi"]
    k = k @ params["wki"] + params["bki"]
    v = v @ params["wvi"] + params["bvi"]
    d = q.shape[-1]
    scores = jnp.einsum("bnd,bmd->bnm", q, k) / jnp.sqrt(jnp.float32(d))
    scores = jnp.where(adj_mat, scores, -jnp.inf)
    attn = jax.nn.softmax(scores, axis=-1)
    ctx = jnp.einsum("bnm,bmd->bnd", attn, v)
    return ctx @ params["wo"] + params["bo"]


def make_params(key, d_in, d_out):
    ks = jax.random.split(key, 16)

    def lin(kw, kb, fan_in, fan_out):
        # Deterministic synthetic init (weights stored pre-transposed: [in, out]).
        w = jax.random.normal(kw, (fan_in, fan_out), jnp.float32) * (1.0 / np.sqrt(fan_in))
        b = jax.random.normal(kb, (1, fan_out), jnp.float32) * 0.02
        return w, b

    p = {}
    p["wq"], p["bq"] = lin(ks[0], ks[1], d_in, d_out)
    p["wk"], p["bk"] = lin(ks[2], ks[3], d_in, d_out)
    p["wv"], p["bv"] = lin(ks[4], ks[5], d_in, d_out)
    p["wqi"], p["bqi"] = lin(ks[6], ks[7], d_out, d_out)
    p["wki"], p["bki"] = lin(ks[8], ks[9], d_out, d_out)
    p["wvi"], p["bvi"] = lin(ks[10], ks[11], d_out, d_out)
    p["wo"], p["bo"] = lin(ks[12], ks[13], d_out, d_out)
    return p


if __name__ == "__main__":
    key = jax.random.PRNGKey(0)
    k_x, k_adj, k_p = jax.random.split(key, 3)

    B, N, D_in, D_out = 2, 8, 16, 32
    node_enc = jax.random.normal(k_x, (B, N, D_in), jnp.float32)
    # Random adjacency with self-loops so every node attends to at least itself
    # (an all-masked row yields NaN in both PyTorch and here).
    adj = jax.random.bernoulli(k_adj, 0.5, (B, N, N))
    adj = jnp.logical_or(adj, jnp.eye(N, dtype=bool)[None, :, :])

    params = make_params(k_p, D_in, D_out)
    ref = gat_reference(node_enc, adj, params)

    # f32 MXU-operand path: exact softmax, tight tolerance vs the unfused reference.
    out_f32 = jax.block_until_ready(gat_forward(node_enc, adj, params))
    np.testing.assert_allclose(np.asarray(out_f32), np.asarray(ref), rtol=2e-3, atol=2e-3)

    # bf16 MXU-operand / f32-accumulate path (MXU peak-rate mode): loose smoke check.
    out_bf16 = jax.block_until_ready(
        gat_forward(node_enc, adj, params, compute_dtype=jnp.bfloat16))
    assert np.isfinite(np.asarray(out_bf16)).all()
    np.testing.assert_allclose(np.asarray(out_bf16), np.asarray(ref), rtol=2e-1, atol=2e-1)

    print("KERNEL_OK")
</pallas_src>

<mosaic_0001>
module attributes {stable_mosaic.version = 11 : i64} {
  func.func @gat_kernel(%arg0: i32, %arg1: memref<1x8x128xf32, #tpu.memory_space<vmem>>, %arg2: memref<1x8x8xi8, #tpu.memory_space<vmem>>, %arg3: memref<128x384xf32, #tpu.memory_space<vmem>>, %arg4: memref<1x384xf32, #tpu.memory_space<vmem>>, %arg5: memref<128x128xf32, #tpu.memory_space<vmem>>, %arg6: memref<1x128xf32, #tpu.memory_space<vmem>>, %arg7: memref<1x8x128xf32, #tpu.memory_space<vmem>>) attributes {dimension_semantics = [#tpu.dimension_semantics<parallel>], iteration_bounds = array<i64: 2>, scalar_prefetch = 0 : i64, scratch_operands = 0 : i64, tpu.core_type = #tpu.core_type<tc>, window_params = [{transform_indices = @transform_0, window_bounds = array<i64: 1, 8, 128>}, {transform_indices = @transform_1, window_bounds = array<i64: 1, 8, 8>}, {pipeline_mode = #tpu.pipeline_mode<synchronous>, transform_indices = @transform_2, window_bounds = array<i64: 128, 384>}, {pipeline_mode = #tpu.pipeline_mode<synchronous>, transform_indices = @transform_3, window_bounds = array<i64: 1, 384>}, {pipeline_mode = #tpu.pipeline_mode<synchronous>, transform_indices = @transform_4, window_bounds = array<i64: 128, 128>}, {pipeline_mode = #tpu.pipeline_mode<synchronous>, transform_indices = @transform_5, window_bounds = array<i64: 1, 128>}, {transform_indices = @transform_6, window_bounds = array<i64: 1, 8, 128>}]} {
    %c0 = arith.constant 0 : index
    %c0_0 = arith.constant 0 : index
    %c0_1 = arith.constant 0 : index
    %0 = vector.load %arg1[%c0, %c0_0, %c0_1] : memref<1x8x128xf32, #tpu.memory_space<vmem>>, vector<1x8x128xf32>
    %1 = vector.shape_cast %0 : vector<1x8x128xf32> to vector<8x128xf32>
    %c0_2 = arith.constant 0 : index
    %c0_3 = arith.constant 0 : index
    %2 = vector.load %arg3[%c0_2, %c0_3] : memref<128x384xf32, #tpu.memory_space<vmem>>, vector<128x384xf32>
    %cst = arith.constant dense<0.000000e+00> : vector<8x384xf32>
    %3 = tpu.matmul %1, %2, %cst {dimension_numbers = #tpu.dot_dimension_numbers<[1], [0], [0], [1], [0, 0, 1, 1], [], []>} : vector<8x128xf32>, vector<128x384xf32>, vector<8x384xf32> -> vector<8x384xf32>
    %c0_4 = arith.constant 0 : index
    %c0_5 = arith.constant 0 : index
    %4 = vector.load %arg4[%c0_4, %c0_5] : memref<1x384xf32, #tpu.memory_space<vmem>>, vector<1x384xf32>
    %5 = vector.broadcast %4 : vector<1x384xf32> to vector<8x384xf32>
    %6 = arith.addf %3, %5 : vector<8x384xf32>
    %7 = vector.extract_strided_slice %6 {offsets = [0, 0], sizes = [8, 128], strides = [1, 1]} : vector<8x384xf32> to vector<8x128xf32>
    %8 = vector.shape_cast %7 : vector<8x128xf32> to vector<1x8x128xf32>
    %9 = vector.extract_strided_slice %6 {offsets = [0, 128], sizes = [8, 128], strides = [1, 1]} : vector<8x384xf32> to vector<8x128xf32>
    %10 = vector.shape_cast %9 : vector<8x128xf32> to vector<1x8x128xf32>
    %11 = vector.extract_strided_slice %6 {offsets = [0, 256], sizes = [8, 128], strides = [1, 1]} : vector<8x384xf32> to vector<8x128xf32>
    %12 = vector.shape_cast %11 : vector<8x128xf32> to vector<1x8x128xf32>
    %cst_6 = arith.constant dense<0.000000e+00> : vector<1x8x8xf32>
    %13 = tpu.matmul %8, %10, %cst_6 {dimension_numbers = #tpu.dot_dimension_numbers<[2], [2], [1], [1], [0, 0, 0, 1, 1, 1], [0], [0]>} : vector<1x8x128xf32>, vector<1x8x128xf32>, vector<1x8x8xf32> -> vector<1x8x8xf32>
    %c0_7 = arith.constant 0 : index
    %c0_8 = arith.constant 0 : index
    %c0_9 = arith.constant 0 : index
    %14 = vector.load %arg2[%c0_7, %c0_8, %c0_9] : memref<1x8x8xi8, #tpu.memory_space<vmem>>, vector<1x8x8xi8>
    %c0_i8 = arith.constant 0 : i8
    %15 = vector.broadcast %c0_i8 : i8 to vector<1x8x8xi8>
    %16 = arith.cmpi ne, %14, %15 : vector<1x8x8xi8>
    %cst_10 = arith.constant 0xFF800000 : f32
    %17 = vector.broadcast %cst_10 : f32 to vector<1x8x8xf32>
    %18 = arith.select %16, %13, %17 : vector<1x8x8xi1>, vector<1x8x8xf32>
    %cst_11 = arith.constant dense<0xFF800000> : vector<1x8xf32>
    %19 = vector.multi_reduction <maximumf>, %18, %cst_11 [2] : vector<1x8x8xf32> to vector<1x8xf32>
    %20 = vector.shape_cast %19 : vector<1x8xf32> to vector<1x8x1xf32>
    %21 = vector.broadcast %20 : vector<1x8x1xf32> to vector<1x8x8xf32>
    %22 = arith.subf %18, %21 : vector<1x8x8xf32>
    %23 = math.exp %22 : vector<1x8x8xf32>
    %cst_12 = arith.constant dense<0.000000e+00> : vector<1x8xf32>
    %24 = vector.multi_reduction <add>, %23, %cst_12 [2] : vector<1x8x8xf32> to vector<1x8xf32>
    %25 = vector.shape_cast %24 : vector<1x8xf32> to vector<1x8x1xf32>
    %26 = vector.broadcast %25 : vector<1x8x1xf32> to vector<1x8x8xf32>
    %27 = arith.divf %23, %26 : vector<1x8x8xf32>
    %cst_13 = arith.constant dense<0.000000e+00> : vector<1x8x128xf32>
    %28 = tpu.matmul %27, %12, %cst_13 {dimension_numbers = #tpu.dot_dimension_numbers<[2], [1], [1], [2], [0, 0, 0, 1, 1, 2], [0], [0]>} : vector<1x8x8xf32>, vector<1x8x128xf32>, vector<1x8x128xf32> -> vector<1x8x128xf32>
    %29 = vector.shape_cast %28 : vector<1x8x128xf32> to vector<8x128xf32>
    %c0_14 = arith.constant 0 : index
    %c0_15 = arith.constant 0 : index
    %30 = vector.load %arg5[%c0_14, %c0_15] : memref<128x128xf32, #tpu.memory_space<vmem>>, vector<128x128xf32>
    %cst_16 = arith.constant dense<0.000000e+00> : vector<8x128xf32>
    %31 = tpu.matmul %29, %30, %cst_16 {dimension_numbers = #tpu.dot_dimension_numbers<[1], [0], [0], [1], [0, 0, 1, 1], [], []>} : vector<8x128xf32>, vector<128x128xf32>, vector<8x128xf32> -> vector<8x128xf32>
    %c0_17 = arith.constant 0 : index
    %c0_18 = arith.constant 0 : index
    %32 = vector.load %arg6[%c0_17, %c0_18] : memref<1x128xf32, #tpu.memory_space<vmem>>, vector<1x128xf32>
    %33 = vector.broadcast %32 : vector<1x128xf32> to vector<8x128xf32>
    %34 = arith.addf %31, %33 : vector<8x128xf32>
    %35 = vector.shape_cast %34 : vector<8x128xf32> to vector<1x8x128xf32>
    %c0_19 = arith.constant 0 : index
    %c0_20 = arith.constant 0 : index
    %c0_21 = arith.constant 0 : index
    %36 = vector.load %arg7[%c0_19, %c0_20, %c0_21] : memref<1x8x128xf32, #tpu.memory_space<vmem>>, vector<1x8x128xf32>
    tpu.vector_store %arg7[%c0_19, %c0_20, %c0_21], %35 {strides = array<i32>} : memref<1x8x128xf32, #tpu.memory_space<vmem>>, vector<1x8x128xf32>,
    return
  }
  func.func @transform_0(%arg0: i32) -> (i32, i32, i32) {
    %c0_i32 = arith.constant 0 : i32
    %c0_i32_0 = arith.constant 0 : i32
    %c0_i32_1 = arith.constant 0 : i32
    return %arg0, %c0_i32, %c0_i32_0 : i32, i32, i32
  }
  func.func @transform_1(%arg0: i32) -> (i32, i32, i32) {
    %c0_i32 = arith.constant 0 : i32
    %c0_i32_0 = arith.constant 0 : i32
    %c0_i32_1 = arith.constant 0 : i32
    return %arg0, %c0_i32, %c0_i32_0 : i32, i32, i32
  }
  func.func @transform_2(%arg0: i32) -> (i32, i32) {
    %c0_i32 = arith.constant 0 : i32
    %c0_i32_0 = arith.constant 0 : i32
    %c0_i32_1 = arith.constant 0 : i32
    return %c0_i32, %c0_i32_0 : i32, i32
  }
  func.func @transform_3(%arg0: i32) -> (i32, i32) {
    %c0_i32 = arith.constant 0 : i32
    %c0_i32_0 = arith.constant 0 : i32
    %c0_i32_1 = arith.constant 0 : i32
    return %c0_i32, %c0_i32_0 : i32, i32
  }
  func.func @transform_4(%arg0: i32) -> (i32, i32) {
    %c0_i32 = arith.constant 0 : i32
    %c0_i32_0 = arith.constant 0 : i32
    %c0_i32_1 = arith.constant 0 : i32
    return %c0_i32, %c0_i32_0 : i32, i32
  }
  func.func @transform_5(%arg0: i32) -> (i32, i32) {
    %c0_i32 = arith.constant 0 : i32
    %c0_i32_0 = arith.constant 0 : i32
    %c0_i32_1 = arith.constant 0 : i32
    return %c0_i32, %c0_i32_0 : i32, i32
  }
  func.func @transform_6(%arg0: i32) -> (i32, i32, i32) {
    %c0_i32 = arith.constant 0 : i32
    %c0_i32_0 = arith.constant 0 : i32
    %c0_i32_1 = arith.constant 0 : i32
    return %arg0, %c0_i32, %c0_i32_0 : i32, i32, i32
  }
}

</mosaic_0001>

<llo_original>
// kernel: tpu_custom_call.1
$region0: #{tpu_custom_call.1}
  #allocation0 [shape = 'u32[]', space=smem, size = 0x4, offset = 0x4, fixed_abs, tag = 'smem constant byte address 0x4 - core index']
  #allocation1 [shape = 'u32[72,128]{1,0:T(1,128)}', space=vmem, size = 0x9000, scoped, tag = 'internal scratch']
  %s0 = inlined_call_operand.hbm [shape: f32[2,8,128], index: 0, kind: input, shape index: {}]
  %s1 = inlined_call_operand.hbm [shape: s8[2,8,8], index: 1, kind: input, shape index: {}]
  %s2 = inlined_call_operand.hbm [shape: f32[128,384], index: 2, kind: input, shape index: {}]
  %s3 = inlined_call_operand.hbm [shape: f32[1,384], index: 3, kind: input, shape index: {}]
  %s4 = inlined_call_operand.hbm [shape: f32[128,128], index: 4, kind: input, shape index: {}]
  %s5 = inlined_call_operand.vmem [shape: f32[1,128], index: 5, kind: input, shape index: {}]
  %s6 = inlined_call_operand.hbm [shape: f32[2,8,128], index: 6, kind: output, shape index: {}]
  %s7 = sld [smem:[#allocation0]]
  $region77: #{tpu_custom_call.1} parent=0
    _
  %s9 = ssub.s32 1, %s7
  %s10 = scalar_select 0, %s9, %s7
  $region1: #{tpu_custom_call.1} parent=0
    #allocation2 [shape = 'u8[8192]{0}', space=vmem, size = 0x2000, scoped, tag = 'input window, operand 0']
    #allocation3 [shape = 's32[2]{0}', space=sflag, size = 0x8, scoped, tag = 'scoped memory for tpu_custom_call.1']
    #allocation4 [shape = 's32[2]{0}', space=sflag, size = 0x8, scoped, tag = 'scoped memory for tpu_custom_call.1']
    #allocation5 [shape = 'u8[2048]{0}', space=vmem, size = 0x800, scoped, tag = 'input window, operand 1']
    #allocation6 [shape = 's32[2]{0}', space=sflag, size = 0x8, scoped, tag = 'scoped memory for tpu_custom_call.1']
    #allocation7 [shape = 'u8[196608]{0}', space=vmem, size = 0x30000, scoped, tag = 'input window, operand 2, single buffered']
    #allocation8 [shape = 'u8[1536]{0}', space=vmem, size = 0x800, scoped, tag = 'input window, operand 3, single buffered']
    #allocation9 [shape = 's32[1]{0}', space=sflag, size = 0x4, scoped, tag = 'scoped memory for tpu_custom_call.1']
    #allocation10 [shape = 'u8[65536]{0}', space=vmem, size = 0x10000, scoped, tag = 'input window, operand 4, single buffered']
    #allocation11 [shape = 'u8[8192]{0}', space=vmem, size = 0x2000, scoped, tag = 'output window, operand 0']
    %11 = vsyncpa [#allocation3], 0
    %s12 = scalar_lea.sflag [#allocation3], 1
    %13 = vsyncpa %s12, 0
    %14 = vsyncpa [#allocation6], 0
    %s15 = scalar_lea.sflag [#allocation6], 1
    %16 = vsyncpa %s15, 0
    %17 = vsyncpa [#allocation9], 0
    %18 = vsyncpa [#allocation4], 0
    %s19 = scalar_lea.sflag [#allocation4], 1
    %20 = vsyncpa %s19, 0
    loop: start=0, step=1, limit=4
    $region2: #{tpu_custom_call.1} parent=1 // loop_pre_header
      _
    $region3: #{tpu_custom_call.1} parent=1 // loop_header
      %s22 = sphi 0, %s26
      %p23 = scmp.ge.s32.totalorder %s22, 4
      %s32 = sphi 0, %s34
      %s35 = sphi 0, %s32
      %s36 = sphi 0, %s35
      %s52 = sphi 0, %s36
      %s58 = sphi 0, %s60
      %s61 = sphi 0, %s58
      %s62 = sphi 0, %s61
      %s78 = sphi 0, %s62
      %s82 = sphi 0, %s82
      %s84 = sphi 0, %s82
      %s85 = sphi 0, %s84
      %s99 = sphi 0, %s85
      %s103 = sphi 0, %s103
      %s105 = sphi 0, %s103
      %s106 = sphi 0, %s105
      %s120 = sphi 0, %s106
      %s124 = sphi 0, %s124
      %s126 = sphi 0, %s124
      %s127 = sphi 0, %s126
      %s141 = sphi 0, %s127
      %s145 = sphi 0, %s145
      %s147 = sphi 0, %s145
      %s148 = sphi 0, %s147
      %s162 = sphi 0, %s148
      %s168 = sphi 0, %s170
      %s171 = sphi 0, %s168
      %s172 = sphi 0, %s171
      %s188 = sphi 0, %s172
    $region4: #{tpu_custom_call.1} parent=1 // loop_header_branch
      %25 = sbr.rel (%p23) target = $region8
    $region5: #{tpu_custom_call.1} parent=1 // loop_body
      %s27 = ssub.s32 %s22, 1
      %s28 = ssub.s32 %s22, 2
      %s29 = sadd.s32 %s22, 1
      %s30 = ssub.s32 %s22, %s29
      %p31 = scmp.eq.s32.totalorder %s30, 0
      %s33 = sadd.s32 %s32, 1
      %s34 = scalar_select %p31, %s32, %s33
      %p37 = pneg %p31
      %p38 = scmp.eq.s32.totalorder %s22, 1
      %p39 = por %p37, %p38
      %p40 = scmp.ne.s32.totalorder %s32, %s35
      %p41 = scmp.eq.s32.totalorder %s22, 0
      %p42 = por %p40, %p41
      %p43 = scmp.ne.s32.totalorder %s32, %s35
      %p44 = scmp.eq.s32.totalorder %s27, 1
      %p45 = por %p43, %p44
      %p46 = scmp.ne.s32.totalorder %s35, %s36
      %p47 = scmp.eq.s32.totalorder %s27, 0
      %p48 = por %p46, %p47
      %p49 = scmp.ne.s32.totalorder %s35, %s36
      %p50 = scmp.eq.s32.totalorder %s28, 1
      %p51 = por %p49, %p50
      %p53 = scmp.ne.s32.totalorder %s36, %s52
      %p54 = scmp.eq.s32.totalorder %s28, 0
      %p55 = por %p53, %p54
      %s56 = ssub.s32 %s22, %s29
      %p57 = scmp.eq.s32.totalorder %s56, 0
      %s59 = sadd.s32 %s58, 1
      %s60 = scalar_select %p57, %s58, %s59
      %p63 = pneg %p57
      %p64 = scmp.eq.s32.totalorder %s22, 1
      %p65 = por %p63, %p64
      %p66 = scmp.ne.s32.totalorder %s58, %s61
      %p67 = scmp.eq.s32.totalorder %s22, 0
      %p68 = por %p66, %p67
      %p69 = scmp.ne.s32.totalorder %s58, %s61
      %p70 = scmp.eq.s32.totalorder %s27, 1
      %p71 = por %p69, %p70
      %p72 = scmp.ne.s32.totalorder %s61, %s62
      %p73 = scmp.eq.s32.totalorder %s27, 0
      %p74 = por %p72, %p73
      %p75 = scmp.ne.s32.totalorder %s61, %s62
      %p76 = scmp.eq.s32.totalorder %s28, 1
      %p77 = por %p75, %p76
      %p79 = scmp.ne.s32.totalorder %s62, %s78
      %p80 = scmp.eq.s32.totalorder %s28, 0
      %p81 = por %p79, %p80
      %s83 = sadd.s32 %s82, 1
      %p86 = scmp.eq.s32.totalorder %s22, 1
      %p87 = scmp.ne.s32.totalorder %s82, %s84
      %p88 = scmp.eq.s32.totalorder %s22, 0
      %p89 = por %p87, %p88
      %p90 = scmp.ne.s32.totalorder %s82, %s84
      %p91 = scmp.eq.s32.totalorder %s27, 1
      %p92 = por %p90, %p91
      %p93 = scmp.ne.s32.totalorder %s84, %s85
      %p94 = scmp.eq.s32.totalorder %s27, 0
      %p95 = por %p93, %p94
      %p96 = scmp.ne.s32.totalorder %s84, %s85
      %p97 = scmp.eq.s32.totalorder %s28, 1
      %p98 = por %p96, %p97
      %p100 = scmp.ne.s32.totalorder %s85, %s99
      %p101 = scmp.eq.s32.totalorder %s28, 0
      %p102 = por %p100, %p101
      %s104 = sadd.s32 %s103, 1
      %p107 = scmp.eq.s32.totalorder %s22, 1
      %p108 = scmp.ne.s32.totalorder %s103, %s105
      %p109 = scmp.eq.s32.totalorder %s22, 0
      %p110 = por %p108, %p109
      %p111 = scmp.ne.s32.totalorder %s103, %s105
      %p112 = scmp.eq.s32.totalorder %s27, 1
      %p113 = por %p111, %p112
      %p114 = scmp.ne.s32.totalorder %s105, %s106
      %p115 = scmp.eq.s32.totalorder %s27, 0
      %p116 = por %p114, %p115
      %p117 = scmp.ne.s32.totalorder %s105, %s106
      %p118 = scmp.eq.s32.totalorder %s28, 1
      %p119 = por %p117, %p118
      %p121 = scmp.ne.s32.totalorder %s106, %s120
      %p122 = scmp.eq.s32.totalorder %s28, 0
      %p123 = por %p121, %p122
      %s125 = sadd.s32 %s124, 1
      %p128 = scmp.eq.s32.totalorder %s22, 1
      %p129 = scmp.ne.s32.totalorder %s124, %s126
      %p130 = scmp.eq.s32.totalorder %s22, 0
      %p131 = por %p129, %p130
      %p132 = scmp.ne.s32.totalorder %s124, %s126
      %p133 = scmp.eq.s32.totalorder %s27, 1
      %p134 = por %p132, %p133
      %p135 = scmp.ne.s32.totalorder %s126, %s127
      %p136 = scmp.eq.s32.totalorder %s27, 0
      %p137 = por %p135, %p136
      %p138 = scmp.ne.s32.totalorder %s126, %s127
      %p139 = scmp.eq.s32.totalorder %s28, 1
      %p140 = por %p138, %p139
      %p142 = scmp.ne.s32.totalorder %s127, %s141
      %p143 = scmp.eq.s32.totalorder %s28, 0
      %p144 = por %p142, %p143
      %s146 = sadd.s32 %s145, 1
      %p149 = scmp.eq.s32.totalorder %s22, 1
      %p150 = scmp.ne.s32.totalorder %s145, %s147
      %p151 = scmp.eq.s32.totalorder %s22, 0
      %p152 = por %p150, %p151
      %p153 = scmp.ne.s32.totalorder %s145, %s147
      %p154 = scmp.eq.s32.totalorder %s27, 1
      %p155 = por %p153, %p154
      %p156 = scmp.ne.s32.totalorder %s147, %s148
      %p157 = scmp.eq.s32.totalorder %s27, 0
      %p158 = por %p156, %p157
      %p159 = scmp.ne.s32.totalorder %s147, %s148
      %p160 = scmp.eq.s32.totalorder %s28, 1
      %p161 = por %p159, %p160
      %p163 = scmp.ne.s32.totalorder %s148, %s162
      %p164 = scmp.eq.s32.totalorder %s28, 0
      %p165 = por %p163, %p164
      %s166 = ssub.s32 %s22, %s29
      %p167 = scmp.eq.s32.totalorder %s166, 0
      %s169 = sadd.s32 %s168, 1
      %s170 = scalar_select %p167, %s168, %s169
      %p173 = pneg %p167
      %p174 = scmp.eq.s32.totalorder %s22, 1
      %p175 = por %p173, %p174
      %p176 = scmp.ne.s32.totalorder %s168, %s171
      %p177 = scmp.eq.s32.totalorder %s22, 0
      %p178 = por %p176, %p177
      %p179 = scmp.ne.s32.totalorder %s168, %s171
      %p180 = scmp.eq.s32.totalorder %s27, 1
      %p181 = por %p179, %p180
      %p182 = scmp.ne.s32.totalorder %s171, %s172
      %p183 = scmp.eq.s32.totalorder %s27, 0
      %p184 = por %p182, %p183
      %p185 = scmp.ne.s32.totalorder %s171, %s172
      %p186 = scmp.eq.s32.totalorder %s28, 1
      %p187 = por %p185, %p186
      %p189 = scmp.ne.s32.totalorder %s172, %s188
      %p190 = scmp.eq.s32.totalorder %s28, 0
      %p191 = por %p189, %p190
      %p192 = scmp.le.s32.totalorder 1, %s22
      %p193 = scmp.lt.s32.totalorder %s22, 3
      %p194 = pnand %p192, %p193
      %p195 = pneg %p194
      // Predicated region
      $region9: #{tpu_custom_call.1} parent=5 // pred_check
        _
      $region10: #{tpu_custom_call.1} parent=5 // pred_check_branch
        %197 = sbr.rel (%p194) target = $region12
      $region11: #{tpu_custom_call.1} parent=5 // pred_region
        %s198 = ssub.s32 %s22, 1
        // Predicated region
        $region13: #{tpu_custom_call.1} parent=11 // pred_check
          %p199 = pneg %p95
        $region14: #{tpu_custom_call.1} parent=11 // pred_check_branch
          %201 = sbr.rel (%p199) target = $region16
        $region15: #{tpu_custom_call.1} parent=11 // pred_region
          %203 = vsyncadd [#allocation6], 0
          %s204 = sshll.u32 %s2, 4
          %s205 = int_to_ptr.hbm [resolvable:$true] %s204
          %s206 = sshll.u32 [#allocation7], 4
          %s207 = int_to_ptr.vmem [resolvable:$true] %s206
          %212 = dma.hbm_to_vmem [thread:$0]  %s205, 6144, %s207, [#allocation6], 384, 384, 24
        $region16: #{tpu_custom_call.1} parent=11 // pred_fallthru
          _
        // Predicated region
        $region17: #{tpu_custom_call.1} parent=11 // pred_check
          %p213 = pneg %p116
        $region18: #{tpu_custom_call.1} parent=11 // pred_check_branch
          %215 = sbr.rel (%p213) target = $region20
        $region19: #{tpu_custom_call.1} parent=11 // pred_region
          %217 = vsyncadd [#allocation9], 0
          %s219 = sshll.u32 %s3, 4
          %s220 = int_to_ptr.hbm [resolvable:$true] %s219
          %s221 = sshll.u32 [#allocation8], 4
          %s222 = int_to_ptr.vmem [resolvable:$true] %s221
          %224 = dma.hbm_to_vmem [thread:$0]  %s220, 48, %s222, [#allocation9]
        $region20: #{tpu_custom_call.1} parent=11 // pred_fallthru
          _
        // Predicated region
        $region21: #{tpu_custom_call.1} parent=11 // pred_check
          %p225 = pneg %p137
        $region22: #{tpu_custom_call.1} parent=11 // pred_check_branch
          %227 = sbr.rel (%p225) target = $region24
        $region23: #{tpu_custom_call.1} parent=11 // pred_region
          %229 = vsyncadd [#allocation9], 0
          %s230 = sshll.u32 %s4, 4
          %s231 = int_to_ptr.hbm [resolvable:$true] %s230
          %s232 = sshll.u32 [#allocation10], 4
          %s233 = int_to_ptr.vmem [resolvable:$true] %s232
          %238 = dma.hbm_to_vmem [thread:$0]  %s231, 2048, %s233, [#allocation9], 128, 128, 8
        $region24: #{tpu_custom_call.1} parent=11 // pred_fallthru
          _
        // Predicated region
        $region25: #{tpu_custom_call.1} parent=11 // pred_check
          %p239 = pneg %p158
        $region26: #{tpu_custom_call.1} parent=11 // pred_check_branch
          %241 = sbr.rel (%p239) target = $region28
        $region27: #{tpu_custom_call.1} parent=11 // pred_region
          _
        $region28: #{tpu_custom_call.1} parent=11 // pred_fallthru
          _
      $region12: #{tpu_custom_call.1} parent=5 // pred_fallthru
        _
      %p242 = scmp.lt.s32.totalorder %s22, 2
      // Predicated region
      $region29: #{tpu_custom_call.1} parent=5 // pred_check
        %p243 = pneg %p242
      $region30: #{tpu_custom_call.1} parent=5 // pred_check_branch
        %245 = sbr.rel (%p243) target = $region32
      $region31: #{tpu_custom_call.1} parent=5 // pred_region
        // Predicated region
        $region33: #{tpu_custom_call.1} parent=31 // pred_check
          %p246 = pneg %p42
        $region34: #{tpu_custom_call.1} parent=31 // pred_check_branch
          %248 = sbr.rel (%p246) target = $region36
        $region35: #{tpu_custom_call.1} parent=31 // pred_region
          %s249 = sand.u32 %s32, 1
          %s250 = scalar_lea.sflag [#allocation3], %s249
          %s251 = sand.u32 %s32, 1
          %s252 = smul.addr %s251, 8
          %s253 = scalar_lea.vmem [#allocation2], %s252
          %255 = vsyncadd %s250, 0
          %s256 = smul.addr %s22, 8
          %s257 = scalar_lea.hbm %s0, %s256
          %s259 = sshll.u32 %s257, 4
          %s260 = int_to_ptr.hbm [resolvable:$true] %s259
          %s261 = sshll.u32 %s253, 4
          %s262 = int_to_ptr.vmem [resolvable:$true] %s261
          %264 = dma.hbm_to_vmem [thread:$0]  %s260, 128, %s262, %s250
        $region36: #{tpu_custom_call.1} parent=31 // pred_fallthru
          _
        // Predicated region
        $region37: #{tpu_custom_call.1} parent=31 // pred_check
          %p265 = pneg %p68
        $region38: #{tpu_custom_call.1} parent=31 // pred_check_branch
          %267 = sbr.rel (%p265) target = $region40
        $region39: #{tpu_custom_call.1} parent=31 // pred_region
          %s268 = sand.u32 %s22, 1
          %s269 = scalar_lea.sflag [#allocation6], %s268
          %s270 = sand.u32 %s58, 1
          %s271 = smul.addr %s270, 2
          %s272 = scalar_lea.vmem [#allocation5], %s271
          %274 = vsyncadd %s269, 0
          %s275 = smul.addr %s22, 2
          %s276 = scalar_lea.hbm %s1, %s275
          %s278 = sshll.u32 %s276, 4
          %s279 = int_to_ptr.hbm [resolvable:$true] %s278
          %s280 = sshll.u32 %s272, 4
          %s281 = int_to_ptr.vmem [resolvable:$true] %s280
          %283 = dma.hbm_to_vmem [thread:$0]  %s279, 32, %s281, %s269
        $region40: #{tpu_custom_call.1} parent=31 // pred_fallthru
          _
      $region32: #{tpu_custom_call.1} parent=5 // pred_fallthru
        _
      %p284 = scmp.le.s32.totalorder 1, %s22
      %p285 = scmp.lt.s32.totalorder %s22, 3
      %p286 = pnand %p284, %p285
      %p287 = pneg %p286
      // Predicated region
      $region41: #{tpu_custom_call.1} parent=5 // pred_check
        _
      $region42: #{tpu_custom_call.1} parent=5 // pred_check_branch
        %289 = sbr.rel (%p286) target = $region44
      $region43: #{tpu_custom_call.1} parent=5 // pred_region
        %s290 = ssub.s32 %s22, 1
        %s291 = sand.u32 %s35, 1
        %s292 = scalar_lea.sflag [#allocation3], %s291
        %s293 = sand.u32 %s35, 1
        %s294 = smul.addr %s293, 8
        %s295 = scalar_lea.vmem [#allocation2], %s294
        // Predicated region
        $region45: #{tpu_custom_call.1} parent=43 // pred_check
          %p296 = pneg %p48
        $region46: #{tpu_custom_call.1} parent=43 // pred_check_branch
          %298 = sbr.rel (%p296) target = $region48
        $region47: #{tpu_custom_call.1} parent=43 // pred_region
          %300 = dma.done %s292, 128
        $region48: #{tpu_custom_call.1} parent=43 // pred_fallthru
          _
        %s301 = sand.u32 %s27, 1
        %s302 = scalar_lea.sflag [#allocation6], %s301
        %s303 = sand.u32 %s61, 1
        %s304 = smul.addr %s303, 2
        %s305 = scalar_lea.vmem [#allocation5], %s304
        // Predicated region
        $region49: #{tpu_custom_call.1} parent=43 // pred_check
          %p306 = pneg %p74
        $region50: #{tpu_custom_call.1} parent=43 // pred_check_branch
          %308 = sbr.rel (%p306) target = $region52
        $region51: #{tpu_custom_call.1} parent=43 // pred_region
          %310 = dma.done %s302, 32
        $region52: #{tpu_custom_call.1} parent=43 // pred_fallthru
          _
        // Predicated region
        $region53: #{tpu_custom_call.1} parent=43 // pred_check
          %p311 = pneg %p95
        $region54: #{tpu_custom_call.1} parent=43 // pred_check_branch
          %313 = sbr.rel (%p311) target = $region56
        $region55: #{tpu_custom_call.1} parent=43 // pred_region
          %315 = dma.done [#allocation6], 6144
        $region56: #{tpu_custom_call.1} parent=43 // pred_fallthru
          _
        // Predicated region
        $region57: #{tpu_custom_call.1} parent=43 // pred_check
          %p316 = pneg %p116
        $region58: #{tpu_custom_call.1} parent=43 // pred_check_branch
          %318 = sbr.rel (%p316) target = $region60
        $region59: #{tpu_custom_call.1} parent=43 // pred_region
          %320 = dma.done [#allocation9], 48
        $region60: #{tpu_custom_call.1} parent=43 // pred_fallthru
          _
        // Predicated region
        $region61: #{tpu_custom_call.1} parent=43 // pred_check
          %p321 = pneg %p137
        $region62: #{tpu_custom_call.1} parent=43 // pred_check_branch
          %323 = sbr.rel (%p321) target = $region64
        $region63: #{tpu_custom_call.1} parent=43 // pred_region
          %325 = dma.done [#allocation9], 2048
        $region64: #{tpu_custom_call.1} parent=43 // pred_fallthru
          _
        %s326 = sand.u32 %s35, 1
        %s327 = scalar_lea.sflag [#allocation3], %s326
        %s328 = sand.u32 %s35, 1
        %s329 = smul.addr %s328, 8
        %s330 = scalar_lea.vmem [#allocation2], %s329
        %p331 = pneg %p48
        %p332 = pneg %p45
        %s333 = sand.u32 %s27, 1
        %s334 = scalar_lea.sflag [#allocation6], %s333
        %s335 = sand.u32 %s61, 1
        %s336 = smul.addr %s335, 2
        %s337 = scalar_lea.vmem [#allocation5], %s336
        %p338 = pneg %p74
        %p339 = pneg %p71
        %p340 = pneg %p95
        %p341 = pneg %p92
        %p342 = pneg %p116
        %p343 = pneg %p113
        %p344 = pneg %p137
        %p345 = pneg %p134
        %p346 = pneg %p158
        %p347 = pneg %p155
        %p348 = pneg %p184
        %p349 = pneg %p181
        %s350 = sand.u32 %s171, 1
        %s351 = scalar_lea.sflag [#allocation4], %s350
        %s352 = sand.u32 %s171, 1
        %s353 = smul.addr %s352, 8
        %s354 = scalar_lea.vmem [#allocation11], %s353
        %v357 = vld [vmem:[%s295] sm:$0xff]
        %v358 = vld [vmem:[#allocation7] sm:$0xff]
        %v359 = vld [vmem:[#allocation7 + $0x8] sm:$0xff]
        %v360 = vld [vmem:[#allocation7 + $0x10] sm:$0xff]
        %v361 = vld [vmem:[#allocation7 + $0x18] sm:$0xff]
        %v362 = vld [vmem:[#allocation7 + $0x20] sm:$0xff]
        %v363 = vld [vmem:[#allocation7 + $0x28] sm:$0xff]
        %v364 = vld [vmem:[#allocation7 + $0x30] sm:$0xff]
        %v365 = vld [vmem:[#allocation7 + $0x38] sm:$0xff]
        %v366 = vld [vmem:[#allocation7 + $0x40] sm:$0xff]
        %v367 = vld [vmem:[#allocation7 + $0x48] sm:$0xff]
        %v368 = vld [vmem:[#allocation7 + $0x50] sm:$0xff]
        %v369 = vld [vmem:[#allocation7 + $0x58] sm:$0xff]
        %v370 = vld [vmem:[#allocation7 + $0x60] sm:$0xff]
        %v371 = vld [vmem:[#allocation7 + $0x68] sm:$0xff]
        %v372 = vld [vmem:[#allocation7 + $0x70] sm:$0xff]
        %v373 = vld [vmem:[#allocation7 + $0x78] sm:$0xff]
        %v374 = vld [vmem:[#allocation7 + $0x80] sm:$0xff]
        %v375 = vld [vmem:[#allocation7 + $0x88] sm:$0xff]
        %v376 = vld [vmem:[#allocation7 + $0x90] sm:$0xff]
        %v377 = vld [vmem:[#allocation7 + $0x98] sm:$0xff]
        %v378 = vld [vmem:[#allocation7 + $0xa0] sm:$0xff]
        %v379 = vld [vmem:[#allocation7 + $0xa8] sm:$0xff]
        %v380 = vld [vmem:[#allocation7 + $0xb0] sm:$0xff]
        %v381 = vld [vmem:[#allocation7 + $0xb8] sm:$0xff]
        %v382 = vld [vmem:[#allocation7 + $0xc0] sm:$0xff]
        %v383 = vld [vmem:[#allocation7 + $0xc8] sm:$0xff]
        %v384 = vld [vmem:[#allocation7 + $0xd0] sm:$0xff]
        %v385 = vld [vmem:[#allocation7 + $0xd8] sm:$0xff]
        %v386 = vld [vmem:[#allocation7 + $0xe0] sm:$0xff]
        %v387 = vld [vmem:[#allocation7 + $0xe8] sm:$0xff]
        %v388 = vld [vmem:[#allocation7 + $0xf0] sm:$0xff]
        %v389 = vld [vmem:[#allocation7 + $0xf8] sm:$0xff]
        %v390 = vld [vmem:[#allocation7 + $0x100] sm:$0xff]
        %v391 = vld [vmem:[#allocation7 + $0x108] sm:$0xff]
        %v392 = vld [vmem:[#allocation7 + $0x110] sm:$0xff]
        %v393 = vld [vmem:[#allocation7 + $0x118] sm:$0xff]
        %v394 = vld [vmem:[#allocation7 + $0x120] sm:$0xff]
        %v395 = vld [vmem:[#allocation7 + $0x128] sm:$0xff]
        %v396 = vld [vmem:[#allocation7 + $0x130] sm:$0xff]
        %v397 = vld [vmem:[#allocation7 + $0x138] sm:$0xff]
        %v398 = vld [vmem:[#allocation7 + $0x140] sm:$0xff]
        %v399 = vld [vmem:[#allocation7 + $0x148] sm:$0xff]
        %v400 = vld [vmem:[#allocation7 + $0x150] sm:$0xff]
        %v401 = vld [vmem:[#allocation7 + $0x158] sm:$0xff]
        %v402 = vld [vmem:[#allocation7 + $0x160] sm:$0xff]
        %v403 = vld [vmem:[#allocation7 + $0x168] sm:$0xff]
        %v404 = vld [vmem:[#allocation7 + $0x170] sm:$0xff]
        %v405 = vld [vmem:[#allocation7 + $0x178] sm:$0xff]
        %v406 = vld [vmem:[#allocation8] sm:$0x7]
        %v408 = vperm.slane %v406, 0
        %v409 = vperm.slane %v406, 1
        %v410 = vperm.slane %v406, 2
        %414 = vmatpush.msra.mxu0 %v403
        %415 = vmatpush.msra.mxu0 %v400
        %416 = vmatpush.msra.mxu0 %v397
        %417 = vmatpush.msra.mxu0 %v394
        %418 = vmatpush.msra.mxu0 %v391
        %419 = vmatpush.msra.mxu0 %v388
        %420 = vmatpush.msra.mxu0 %v385
        %421 = vmatpush.msra.mxu0 %v382
        %422 = vmatpush.msra.mxu0 %v379
        %423 = vmatpush.msra.mxu0 %v376
        %424 = vmatpush.msra.mxu0 %v373
        %425 = vmatpush.msra.mxu0 %v370
        %426 = vmatpush.msra.mxu0 %v367
        %427 = vmatpush.msra.mxu0 %v364
        %428 = vmatpush.msra.mxu0 %v361
        %429 = vmatpush.msra.mxu0 %v358
        %430 = vmatmul.f32.gmra.mxu0 %v357
        %v431 = vpop.f32.mrf.mxu0
        %v432 = vadd.f32 %v408, %v431
        %433 = vdwg.mxu0
        %434 = vmatpush.msra.mxu0 %v404
        %435 = vmatpush.msra.mxu0 %v401
        %436 = vmatpush.msra.mxu0 %v398
        %437 = vmatpush.msra.mxu0 %v395
        %438 = vmatpush.msra.mxu0 %v392
        %439 = vmatpush.msra.mxu0 %v389
        %440 = vmatpush.msra.mxu0 %v386
        %441 = vmatpush.msra.mxu0 %v383
        %442 = vmatpush.msra.mxu0 %v380
        %443 = vmatpush.msra.mxu0 %v377
        %444 = vmatpush.msra.mxu0 %v374
        %445 = vmatpush.msra.mxu0 %v371
        %446 = vmatpush.msra.mxu0 %v368
        %447 = vmatpush.msra.mxu0 %v365
        %448 = vmatpush.msra.mxu0 %v362
        %449 = vmatpush.msra.mxu0 %v359
        %450 = vmatmul.f32.gmra.mxu0 %v357
        %v451 = vpop.f32.mrf.mxu0
        %v452 = vadd.f32 %v409, %v451
        %453 = vdwg.mxu0
        %454 = vmatpush.msra.mxu0 %v405
        %455 = vmatpush.msra.mxu0 %v402
        %456 = vmatpush.msra.mxu0 %v399
        %457 = vmatpush.msra.mxu0 %v396
        %458 = vmatpush.msra.mxu0 %v393
        %459 = vmatpush.msra.mxu0 %v390
        %460 = vmatpush.msra.mxu0 %v387
        %461 = vmatpush.msra.mxu0 %v384
        %462 = vmatpush.msra.mxu0 %v381
        %463 = vmatpush.msra.mxu0 %v378
        %464 = vmatpush.msra.mxu0 %v375
        %465 = vmatpush.msra.mxu0 %v372
        %466 = vmatpush.msra.mxu0 %v369
        %467 = vmatpush.msra.mxu0 %v366
        %468 = vmatpush.msra.mxu0 %v363
        %469 = vmatpush.msra.mxu0 %v360
        %470 = vmatmul.f32.gmra.mxu0 %v357
        %v471 = vpop.f32.mrf.mxu0
        %v472 = vadd.f32 %v410, %v471
        %473 = vdwg.mxu0
        %474 = vmatpush.xpose.msra.mxu0 0.0
        %475 = vmatpush.xpose.msra.mxu0 0.0
        %476 = vmatpush.xpose.msra.mxu0 0.0
        %477 = vmatpush.xpose.msra.mxu0 0.0
        %478 = vmatpush.xpose.msra.mxu0 0.0
        %479 = vmatpush.xpose.msra.mxu0 0.0
        %480 = vmatpush.xpose.msra.mxu0 0.0
        %481 = vmatpush.xpose.msra.mxu0 0.0
        %482 = vmatpush.xpose.msra.mxu0 0.0
        %483 = vmatpush.xpose.msra.mxu0 0.0
        %484 = vmatpush.xpose.msra.mxu0 0.0
        %485 = vmatpush.xpose.msra.mxu0 0.0
        %486 = vmatpush.xpose.msra.mxu0 0.0
        %487 = vmatpush.xpose.msra.mxu0 0.0
        %488 = vmatpush.xpose.msra.mxu0 0.0
        %489 = vmatpush.xpose.msra.mxu0 %v452
        %490 = vmatmul.f32.gmra.mxu0 %v432
        %v491 = vpop.f32.mrf.mxu0
        %v492 = vadd.f32 0.0, %v491
        %493 = vdwg.mxu0
        %v494 = vld [vmem:[%s305] sm:$0x3]
        %vm495 = vnez %v494
        %v496 = vsel %vm495, 16843009, 0
        %v497 = vunpack.c.0.s8 %v496
        %vm498 = vcmp.ne.s32.totalorder %v497, 0
        %v499 = vsel %vm498, %v492, -inf
        %vm500 = vcmask 64512
        %v501 = vsel %vm500, %v499, -inf
        %502 = vmax.xlane.f32.xlu0 %v501
        %v503 = vpop.xlane.xlu0 %502
        %v504 = vsub.f32 %v499, %v503
        %v505 = vmul.f32 %v504, 1.442695
        %v506 = vpow.pop %v505
        %v507 = vsel %vm500, %v506, 0.0
        %508 = vadd.xlane.f32.xlu0 %v507
        %v509 = vpop.xlane.xlu0 %508
        %v510 = vrcp.pop %v509
        %v511 = vmul.f32 %v509, %v510
        %v512 = vsub.f32 1.0, %v511
        %v513 = vmul.f32 %v510, %v512
        %v514 = vadd.f32 %v510, %v513
        %vm515 = vweird.f32 %v509
        %vm516 = vweird.f32 %v510
        %vm517 = vmor %vm515, %vm516
        %v518 = vsel %vm517, %v510, %v514
        %v519 = vand.u32 2147483647, %v509
        %vm520 = vcmp.eq.f32.partialorder %v519, 8.507059e+37
        %v521 = vand.u32 %v509, 2147483648
        %v522 = vor.u32 1.1754944e-38, %v521
        %v523 = vsel %vm520, %v522, %v518
        %v524 = vmul.f32 %v506, %v523
        %v526 = vsel %vm500, %v524, 0
        %528 = vmatpush.msra.mxu0 0.0
        %529 = vmatpush.msra.mxu0 0.0
        %530 = vmatpush.msra.mxu0 0.0
        %531 = vmatpush.msra.mxu0 0.0
        %532 = vmatpush.msra.mxu0 0.0
        %533 = vmatpush.msra.mxu0 0.0
        %534 = vmatpush.msra.mxu0 0.0
        %535 = vmatpush.msra.mxu0 0.0
        %536 = vmatpush.msra.mxu0 0.0
        %537 = vmatpush.msra.mxu0 0.0
        %538 = vmatpush.msra.mxu0 0.0
        %539 = vmatpush.msra.mxu0 0.0
        %540 = vmatpush.msra.mxu0 0.0
        %541 = vmatpush.msra.mxu0 0.0
        %542 = vmatpush.msra.mxu0 0.0
        %543 = vmatpush.msra.mxu0 %v472
        %544 = vmatmul.f32.gmra.mxu0 %v526
        %v545 = vpop.f32.mrf.mxu0
        %v546 = vadd.f32 0.0, %v545
        %547 = vdwg.mxu0
        %v548 = vld [vmem:[#allocation10] sm:$0xff]
        %v549 = vld [vmem:[#allocation10 + $0x8] sm:$0xff]
        %v550 = vld [vmem:[#allocation10 + $0x10] sm:$0xff]
        %v551 = vld [vmem:[#allocation10 + $0x18] sm:$0xff]
        %v552 = vld [vmem:[#allocation10 + $0x20] sm:$0xff]
        %v553 = vld [vmem:[#allocation10 + $0x28] sm:$0xff]
        %v554 = vld [vmem:[#allocation10 + $0x30] sm:$0xff]
        %v555 = vld [vmem:[#allocation10 + $0x38] sm:$0xff]
        %v556 = vld [vmem:[#allocation10 + $0x40] sm:$0xff]
        %v557 = vld [vmem:[#allocation10 + $0x48] sm:$0xff]
        %v558 = vld [vmem:[#allocation10 + $0x50] sm:$0xff]
        %v559 = vld [vmem:[#allocation10 + $0x58] sm:$0xff]
        %v560 = vld [vmem:[#allocation10 + $0x60] sm:$0xff]
        %v561 = vld [vmem:[#allocation10 + $0x68] sm:$0xff]
        %v562 = vld [vmem:[#allocation10 + $0x70] sm:$0xff]
        %v563 = vld [vmem:[#allocation10 + $0x78] sm:$0xff]
        %v564 = vld [vmem:[%s5] sm:$0x1]
        %v566 = vperm.slane %v564, 0
        %568 = vmatpush.msra.mxu0 %v563
        %569 = vmatpush.msra.mxu0 %v562
        %570 = vmatpush.msra.mxu0 %v561
        %571 = vmatpush.msra.mxu0 %v560
        %572 = vmatpush.msra.mxu0 %v559
        %573 = vmatpush.msra.mxu0 %v558
        %574 = vmatpush.msra.mxu0 %v557
        %575 = vmatpush.msra.mxu0 %v556
        %576 = vmatpush.msra.mxu0 %v555
        %577 = vmatpush.msra.mxu0 %v554
        %578 = vmatpush.msra.mxu0 %v553
        %579 = vmatpush.msra.mxu0 %v552
        %580 = vmatpush.msra.mxu0 %v551
        %581 = vmatpush.msra.mxu0 %v550
        %582 = vmatpush.msra.mxu0 %v549
        %583 = vmatpush.msra.mxu0 %v548
        %584 = vmatmul.f32.gmra.mxu0 %v546
        %v585 = vpop.f32.mrf.mxu0
        %v586 = vadd.f32 %v566, %v585
        %587 = vdwg.mxu0
        %588 = vst [vmem:[%s354] sm:$0xff] %v586
        %s589 = sand.u32 %s171, 1
        %s590 = scalar_lea.sflag [#allocation4], %s589
        %s591 = sand.u32 %s171, 1
        %s592 = smul.addr %s591, 8
        %s593 = scalar_lea.vmem [#allocation11], %s592
        // Predicated region
        $region65: #{tpu_custom_call.1} parent=43 // pred_check
          %p594 = pneg %p181
        $region66: #{tpu_custom_call.1} parent=43 // pred_check_branch
          %596 = sbr.rel (%p594) target = $region68
        $region67: #{tpu_custom_call.1} parent=43 // pred_region
          %598 = vsyncadd %s590, 0
          %s599 = smul.addr %s27, 8
          %s600 = scalar_lea.hbm %s6, %s599
          %s602 = sshll.u32 %s593, 4
          %s603 = int_to_ptr.vmem [resolvable:$true] %s602
          %s604 = sshll.u32 %s600, 4
          %s605 = int_to_ptr.hbm [resolvable:$true] %s604
          %607 = dma.vmem_to_hbm [thread:$0]  %s603, 128, %s605, %s590
        $region68: #{tpu_custom_call.1} parent=43 // pred_fallthru
          _
      $region44: #{tpu_custom_call.1} parent=5 // pred_fallthru
        _
      %p608 = scmp.le.s32.totalorder 2, %s22
      // Predicated region
      $region69: #{tpu_custom_call.1} parent=5 // pred_check
        %p609 = pneg %p608
      $region70: #{tpu_custom_call.1} parent=5 // pred_check_branch
        %611 = sbr.rel (%p609) target = $region72
      $region71: #{tpu_custom_call.1} parent=5 // pred_region
        %s612 = ssub.s32 %s22, 2
        // Predicated region
        $region73: #{tpu_custom_call.1} parent=71 // pred_check
          %p613 = pneg %p187
        $region74: #{tpu_custom_call.1} parent=71 // pred_check_branch
          %615 = sbr.rel (%p613) target = $region76
        $region75: #{tpu_custom_call.1} parent=71 // pred_region
          %s616 = sand.u32 %s172, 1
          %s617 = scalar_lea.sflag [#allocation4], %s616
          %s618 = sand.u32 %s172, 1
          %s619 = smul.addr %s618, 8
          %s620 = scalar_lea.vmem [#allocation11], %s619
          %622 = dma.done %s617, 128
        $region76: #{tpu_custom_call.1} parent=71 // pred_fallthru
          _
      $region72: #{tpu_custom_call.1} parent=5 // pred_fallthru
        _
    $region6: #{tpu_custom_call.1} parent=1 // loop_footer
      %s26 = sadd.s32 1, %s22
    $region7: #{tpu_custom_call.1} parent=1 // loop_footer_branch
      %21 = sbr.rel target = $region3
    $region8: #{tpu_custom_call.1} parent=1 // loop_exit
      _
    %623 = vsyncpa [#allocation3], 1
    %s624 = scalar_lea.sflag [#allocation3], 1
    %625 = vsyncpa %s624, 1
    %626 = vsyncpa [#allocation6], 1
    %s627 = scalar_lea.sflag [#allocation6], 1
    %628 = vsyncpa %s627, 1
    %629 = vsyncpa [#allocation9], 1
    %630 = vsyncpa [#allocation4], 1
    %s631 = scalar_lea.sflag [#allocation4], 1
    %632 = vsyncpa %s631, 1

</llo_original>
